<compile_context>
chip_gen: v7x
topology: tpu7x:2x2x1
jax: 0.10.0
libtpu: 0.0.40
codegen_flags: <defaults>
</compile_context>

<pallas_src>
import functools

import jax
import jax.numpy as jnp
from jax import lax
from jax.experimental import pallas as pl
from jax.experimental.pallas import tpu as pltpu

# Conservative default that fits v7x's 64 MiB physical VMEM with headroom.
# On v5e/v6e (128 MiB) this can be raised to ~96-112 MiB together with larger
# block_kv for better HBM-roofline utilization.
_DEFAULT_VMEM_LIMIT = 48 * 1024 * 1024


def _qkv_proj_kernel(x_ref, w_ref, qkv_ref):
    """One (batch, row-block, q/k/v) step of the fused QKV projection.

    x_ref:   (1, rows, d_in)        VMEM
    w_ref:   (1, d_in, H*d_out)     VMEM  (one of q/k/v fused-head weights;
                                     1/sqrt(d_out) folded into the q weight)
    qkv_ref: (1, 1, rows, H*d_out)  VMEM  lane-dense output slab
    """
    qkv_ref[0, 0] = jnp.dot(
        x_ref[0], w_ref[0], preferred_element_type=jnp.float32
    ).astype(qkv_ref.dtype)


def _flash_attn_kernel(q_ref, k_ref, v_ref, o_ref, m_sc, l_sc, acc_sc, *,
                       tq, tk, d_out, num_heads, approx_recip):
    """One (batch, q_block, kv_block) step of causal flash attention, all heads.

    q_ref: (1, 1, tq, H*d_out)   k_ref/v_ref: (1, 1, tk, H*d_out)
    o_ref: (1, tq, H*d_out)
    scratch: m/l (H, tq, 1) f32 (running max / denom), acc (H, tq, d_out) f32
    """
    qi = pl.program_id(1)
    ki = pl.program_id(2)

    @pl.when(ki == 0)
    def _init():
        m_sc[...] = jnp.full(m_sc.shape, -jnp.inf, dtype=m_sc.dtype)
        l_sc[...] = jnp.zeros(l_sc.shape, dtype=l_sc.dtype)
        acc_sc[...] = jnp.zeros(acc_sc.shape, dtype=acc_sc.dtype)

    q_start = qi * tq
    kv_start = ki * tk
    q_end = q_start + tq - 1      # last query row of this q block
    kv_end = kv_start + tk - 1    # last key/value col of this kv block

    def process(apply_mask):
        q2 = q_ref[0, 0]          # (tq, H*d_out), already scaled by 1/sqrt(d)
        k2 = k_ref[0, 0]          # (tk, H*d_out)
        v2 = v_ref[0, 0]          # (tk, H*d_out)
        if apply_mask:
            row = q_start + lax.broadcasted_iota(jnp.int32, (tq, tk), 0)
            col = kv_start + lax.broadcasted_iota(jnp.int32, (tq, tk), 1)
            col_gt_row = col > row
        # Per-head static loop over lane slices (H is small / static).
        for h in range(num_heads):
            sl = slice(h * d_out, (h + 1) * d_out)
            q_h = q2[:, sl]       # (tq, d_out)
            k_h = k2[:, sl]       # (tk, d_out)
            v_h = v2[:, sl]       # (tk, d_out)
            # scores = q_h @ k_h^T without materializing a transpose
            s_h = lax.dot_general(q_h, k_h, (((1,), (1,)), ((), ())),
                                  preferred_element_type=jnp.float32)  # (tq,tk)
            if apply_mask:
                s_h = jnp.where(col_gt_row, -jnp.inf, s_h)
            m_prev = m_sc[h]                                           # (tq,1)
            m_new = jnp.maximum(m_prev, jnp.max(s_h, axis=-1, keepdims=True))
            alpha = jnp.exp(m_prev - m_new)
            p_h = jnp.exp(s_h - m_new)                                 # (tq,tk)
            l_sc[h] = alpha * l_sc[h] + jnp.sum(p_h, axis=-1, keepdims=True)
            acc_sc[h] = alpha * acc_sc[h] + jnp.dot(
                p_h.astype(v_h.dtype), v_h,
                preferred_element_type=jnp.float32)                    # (tq,d)
            m_sc[h] = m_new

    # Strictly-below-diagonal tile: every col <= every row -> no mask work.
    @pl.when(kv_end <= q_start)
    def _below_diag():
        process(apply_mask=False)

    # Diagonal-crossing tile: apply the causal mask.
    @pl.when(jnp.logical_and(kv_end > q_start, kv_start <= q_end))
    def _on_diag():
        process(apply_mask=True)

    # Fully-above-diagonal tiles: neither branch runs (and their K/V DMA was
    # already suppressed by the clamped index_map).

    @pl.when(ki == pl.num_programs(2) - 1)
    def _finalize():
        # Normalize per head, then one relayout (concat along lanes) and one
        # dense (tq, H*d_out) store instead of H masked 16-lane stores.
        ctx = jnp.concatenate(
            [acc_sc[h] * pl.reciprocal(l_sc[h], approx=approx_recip)
             for h in range(num_heads)],
            axis=-1)
        o_ref[0] = ctx.astype(o_ref.dtype)


def multi_head_attention(x, wq, wk, wv, *, block_q=256, block_kv=256,
                         proj_rows=512, compute_dtype=None, approx_recip=True,
                         vmem_limit_bytes=_DEFAULT_VMEM_LIMIT):
    """x: (B, S, d_in); wq/wk/wv: (H, d_in, d_out) -> (B, S, H*d_out).

    Matches torch.cat([CausalSelfAttention_h(x) for h], dim=-1) in eval mode.
    """
    B, S, d_in = x.shape
    H, _, d_out = wq.shape
    Hd = H * d_out
    compute_dtype = jnp.dtype(compute_dtype if compute_dtype is not None
                              else x.dtype)

    tq = min(block_q, S)
    tk = min(block_kv, S)
    if S % tq != 0 or S % tk != 0:
        raise ValueError(f"S={S} must be divisible by block_q={tq} and "
                         f"block_kv={tk}")

    # Projection row tile decoupled from attention tiling (memory-bound pass).
    rows = min(proj_rows, S)
    if S % rows != 0:
        rows = tq

    # Fold 1/sqrt(d_out) into Wq on the host; fuse all heads of each of
    # q/k/v into one (d_in, H*d_out) weight (head-major along columns).
    scale = 1.0 / (d_out ** 0.5)
    wq_t = jnp.transpose(wq * scale, (1, 0, 2)).reshape(d_in, Hd)
    wk_t = jnp.transpose(wk, (1, 0, 2)).reshape(d_in, Hd)
    wv_t = jnp.transpose(wv, (1, 0, 2)).reshape(d_in, Hd)
    w_fused = jnp.stack([wq_t, wk_t, wv_t], axis=0).astype(compute_dtype)
    x_c = x.astype(compute_dtype)

    # Pass 1: fused QKV projection -> lane-dense qkv (B, 3, S, H*d_out).
    # The q/k/v axis is a grid axis so only one third of the fused weight is
    # resident at a time (v7x VMEM safety for large d_in / many heads).
    qkv = pl.pallas_call(
        _qkv_proj_kernel,
        out_shape=jax.ShapeDtypeStruct((B, 3, S, Hd), compute_dtype),
        grid_spec=pltpu.PrefetchScalarGridSpec(
            num_scalar_prefetch=0,
            grid=(B, S // rows, 3),
            in_specs=[
                # x block is reused across the inner q/k/v axis (index does
                # not change with c -> no re-DMA).
                pl.BlockSpec((1, rows, d_in), lambda b, r, c: (b, r, 0)),
                pl.BlockSpec((1, d_in, Hd), lambda b, r, c: (c, 0, 0)),
            ],
            out_specs=pl.BlockSpec((1, 1, rows, Hd),
                                   lambda b, r, c: (b, c, r, 0)),
        ),
        compiler_params=pltpu.CompilerParams(
            dimension_semantics=("parallel", "parallel", "arbitrary"),
            vmem_limit_bytes=vmem_limit_bytes),
    )(x_c, w_fused)

    # Pass 2: causal flash attention; lane-dense output (B, S, H*d_out).
    # K/V block indices are clamped to the last causally-valid kv block so
    # fully-masked tiles are never fetched from HBM.
    out = pl.pallas_call(
        functools.partial(_flash_attn_kernel, tq=tq, tk=tk, d_out=d_out,
                          num_heads=H, approx_recip=approx_recip),
        out_shape=jax.ShapeDtypeStruct((B, S, Hd), x.dtype),
        grid_spec=pltpu.PrefetchScalarGridSpec(
            num_scalar_prefetch=0,
            grid=(B, S // tq, S // tk),
            in_specs=[
                # Q slab = qkv[:, 0]
                pl.BlockSpec((1, 1, tq, Hd),
                             lambda b, qi, ki: (b, 0, qi, 0)),
                # K slab = qkv[:, 1], clamped to last valid kv block
                pl.BlockSpec(
                    (1, 1, tk, Hd),
                    lambda b, qi, ki:
                        (b, 1, jnp.minimum(ki, (qi * tq + tq - 1) // tk), 0)),
                # V slab = qkv[:, 2], clamped to last valid kv block
                pl.BlockSpec(
                    (1, 1, tk, Hd),
                    lambda b, qi, ki:
                        (b, 2, jnp.minimum(ki, (qi * tq + tq - 1) // tk), 0)),
            ],
            out_specs=pl.BlockSpec((1, tq, Hd), lambda b, qi, ki: (b, qi, 0)),
            scratch_shapes=[
                pltpu.VMEM((H, tq, 1), jnp.float32),      # m (running max)
                pltpu.VMEM((H, tq, 1), jnp.float32),      # l (running denom)
                pltpu.VMEM((H, tq, d_out), jnp.float32),  # acc
            ],
        ),
        compiler_params=pltpu.CompilerParams(
            # B * (S/tq) should be >= 2 (and even-ish) for v7x's two cores.
            dimension_semantics=("parallel", "parallel", "arbitrary"),
            vmem_limit_bytes=vmem_limit_bytes),
    )(qkv, qkv, qkv)

    return out


def reference_multi_head_attention(x, wq, wk, wv):
    """Pure-JAX reference mirroring the PyTorch forward (eval mode)."""
    B, S, d_in = x.shape
    H, _, d_out = wq.shape
    mask = jnp.triu(jnp.ones((S, S), dtype=bool), k=1)
    outs = []
    for h in range(H):
        q = x @ wq[h]
        k = x @ wk[h]
        v = x @ wv[h]
        scores = jnp.einsum("bsd,btd->bst", q, k)
        scores = jnp.where(mask[None], -jnp.inf, scores)
        w = jax.nn.softmax(scores / (d_out ** 0.5), axis=-1)
        outs.append(jnp.einsum("bst,btd->bsd", w, v))
    return jnp.concatenate(outs, axis=-1)


if __name__ == "__main__":
    # Small shapes consistent with the module's forward (context_length = S).
    B, S, d_in, d_out, H = 2, 32, 32, 16, 4
    dropout = 0.0  # eval-mode / no-op dropout

    key = jax.random.PRNGKey(0)
    kx, kq, kk, kv = jax.random.split(key, 4)

    x = jax.random.normal(kx, (B, S, d_in), dtype=jnp.float32)
    # deterministic synthetic weights (nn.Linear-like scale), as (H, d_in, d_out)
    bound = 1.0 / (d_in ** 0.5)
    wq = jax.random.uniform(kq, (H, d_in, d_out), jnp.float32, -bound, bound)
    wk = jax.random.uniform(kk, (H, d_in, d_out), jnp.float32, -bound, bound)
    wv = jax.random.uniform(kv, (H, d_in, d_out), jnp.float32, -bound, bound)

    ref = reference_multi_head_attention(x, wq, wk, wv)

    # 1) Tiled path (4x4 q/kv blocks), f32 compute, exact reciprocal:
    #    exercises online softmax, causal tile skip, clamped K/V DMA indices,
    #    masked vs unmasked tile branches.  Tight tolerance.
    out_tiled = multi_head_attention(x, wq, wk, wv, block_q=8, block_kv=8,
                                     compute_dtype=jnp.float32,
                                     approx_recip=False)
    jax.block_until_ready(out_tiled)
    assert out_tiled.shape == (B, S, H * d_out), out_tiled.shape
    assert jnp.allclose(out_tiled, ref, atol=1e-5, rtol=1e-5), float(
        jnp.max(jnp.abs(out_tiled - ref)))

    # 2) Default perf path: single block at this S, bf16 MXU inputs with f32
    #    accumulation, EUP approximate reciprocal -> looser tolerance.
    out_fast = multi_head_attention(x, wq, wk, wv,
                                    compute_dtype=jnp.bfloat16,
                                    approx_recip=True)
    jax.block_until_ready(out_fast)
    assert out_fast.shape == (B, S, H * d_out), out_fast.shape
    assert jnp.allclose(out_fast, ref, atol=5e-2, rtol=5e-2), float(
        jnp.max(jnp.abs(out_fast - ref)))

    print("KERNEL_OK")
</pallas_src>

<mosaic_0001>
module attributes {stable_mosaic.version = 11 : i64} {
  func.func @_qkv_proj_kernel(%arg0: i32, %arg1: i32, %arg2: i32, %arg3: memref<1x32x32xf32, #tpu.memory_space<vmem>>, %arg4: memref<1x32x64xf32, #tpu.memory_space<vmem>>, %arg5: memref<1x1x32x64xf32, #tpu.memory_space<vmem>>) attributes {dimension_semantics = [#tpu.dimension_semantics<parallel>, #tpu.dimension_semantics<parallel>, #tpu.dimension_semantics<arbitrary>], iteration_bounds = array<i64: 2, 1, 3>, scalar_prefetch = 0 : i64, scratch_operands = 0 : i64, tpu.core_type = #tpu.core_type<tc>, window_params = [{transform_indices = @transform_0, window_bounds = array<i64: 1, 32, 32>}, {transform_indices = @transform_1, window_bounds = array<i64: 1, 32, 64>}, {transform_indices = @transform_2, window_bounds = array<i64: 1, 1, 32, 64>}]} {
    %c0 = arith.constant 0 : index
    %c0_0 = arith.constant 0 : index
    %c0_1 = arith.constant 0 : index
    %0 = vector.load %arg3[%c0, %c0_0, %c0_1] : memref<1x32x32xf32, #tpu.memory_space<vmem>>, vector<1x32x32xf32>
    %1 = vector.shape_cast %0 : vector<1x32x32xf32> to vector<32x32xf32>
    %c0_2 = arith.constant 0 : index
    %c0_3 = arith.constant 0 : index
    %c0_4 = arith.constant 0 : index
    %2 = vector.load %arg4[%c0_2, %c0_3, %c0_4] : memref<1x32x64xf32, #tpu.memory_space<vmem>>, vector<1x32x64xf32>
    %3 = vector.shape_cast %2 : vector<1x32x64xf32> to vector<32x64xf32>
    %cst = arith.constant dense<0.000000e+00> : vector<32x64xf32>
    %4 = tpu.matmul %1, %3, %cst {dimension_numbers = #tpu.dot_dimension_numbers<[1], [0], [0], [1], [0, 0, 1, 1], [], []>} : vector<32x32xf32>, vector<32x64xf32>, vector<32x64xf32> -> vector<32x64xf32>
    %c0_5 = arith.constant 0 : index
    %c0_6 = arith.constant 0 : index
    %c0_7 = arith.constant 0 : index
    %c0_8 = arith.constant 0 : index
    %5 = vector.load %arg5[%c0_5, %c0_6, %c0_7, %c0_8] : memref<1x1x32x64xf32, #tpu.memory_space<vmem>>, vector<1x1x32x64xf32>
    %6 = vector.shape_cast %5 : vector<1x1x32x64xf32> to vector<32x64xf32>
    %7 = vector.shape_cast %4 : vector<32x64xf32> to vector<1x1x32x64xf32>
    tpu.vector_store %arg5[%c0_5, %c0_6, %c0_7, %c0_8], %7 {strides = array<i32>} : memref<1x1x32x64xf32, #tpu.memory_space<vmem>>, vector<1x1x32x64xf32>,
    return
  }
  func.func @transform_0(%arg0: i32, %arg1: i32, %arg2: i32) -> (i32, i32, i32) {
    %c0_i32 = arith.constant 0 : i32
    %c0_i32_0 = arith.constant 0 : i32
    return %arg0, %arg1, %c0_i32 : i32, i32, i32
  }
  func.func @transform_1(%arg0: i32, %arg1: i32, %arg2: i32) -> (i32, i32, i32) {
    %c0_i32 = arith.constant 0 : i32
    %c0_i32_0 = arith.constant 0 : i32
    %c0_i32_1 = arith.constant 0 : i32
    return %arg2, %c0_i32, %c0_i32_0 : i32, i32, i32
  }
  func.func @transform_2(%arg0: i32, %arg1: i32, %arg2: i32) -> (i32, i32, i32, i32) {
    %c0_i32 = arith.constant 0 : i32
    %c0_i32_0 = arith.constant 0 : i32
    return %arg0, %arg2, %arg1, %c0_i32 : i32, i32, i32, i32
  }
}

</mosaic_0001>

<llo_original>
// kernel: tpu_custom_call.1
$region0: #{tpu_custom_call.1}
  #allocation0 [shape = 'u32[]', space=smem, size = 0x4, offset = 0x4, fixed_abs, tag = 'smem constant byte address 0x4 - core index']
  #allocation1 [shape = 'u32[144,128]{1,0:T(1,128)}', space=vmem, size = 0x12000, scoped, tag = 'internal scratch']
  %s0 = inlined_call_operand.hbm [shape: f32[2,32,32], index: 0, kind: input, shape index: {}]
  %s1 = inlined_call_operand.hbm [shape: f32[3,32,64], index: 1, kind: input, shape index: {}]
  %s2 = inlined_call_operand.hbm [shape: f32[2,3,32,64], index: 2, kind: output, shape index: {}]
  %s3 = sld [smem:[#allocation0]]
  $region49: #{tpu_custom_call.1} parent=0
    _
  %s5 = ssub.s32 1, %s3
  %s6 = scalar_select 0, %s5, %s3
  $region1: #{tpu_custom_call.1} parent=0
    #allocation2 [shape = 'u8[32768]{0}', space=vmem, size = 0x8000, scoped, tag = 'input window, operand 0']
    #allocation3 [shape = 's32[2]{0}', space=sflag, size = 0x8, scoped, tag = 'scoped memory for tpu_custom_call.1']
    #allocation4 [shape = 's32[2]{0}', space=sflag, size = 0x8, scoped, tag = 'scoped memory for tpu_custom_call.1']
    #allocation5 [shape = 'u8[32768]{0}', space=vmem, size = 0x8000, scoped, tag = 'input window, operand 1']
    #allocation6 [shape = 's32[2]{0}', space=sflag, size = 0x8, scoped, tag = 'scoped memory for tpu_custom_call.1']
    #allocation7 [shape = 'u8[32768]{0}', space=vmem, size = 0x8000, scoped, tag = 'output window, operand 0']
    %7 = vsyncpa [#allocation3], 0
    %s8 = scalar_lea.sflag [#allocation3], 1
    %9 = vsyncpa %s8, 0
    %10 = vsyncpa [#allocation6], 0
    %s11 = scalar_lea.sflag [#allocation6], 1
    %12 = vsyncpa %s11, 0
    %13 = vsyncpa [#allocation4], 0
    %s14 = scalar_lea.sflag [#allocation4], 1
    %15 = vsyncpa %s14, 0
    loop: start=0, step=1, limit=8
    $region2: #{tpu_custom_call.1} parent=1 // loop_pre_header
      _
    $region3: #{tpu_custom_call.1} parent=1 // loop_header
      %s17 = sphi 0, %s21
      %p18 = scmp.ge.s32.totalorder %s17, 8
      %s24 = sphi 0, %s43
      %s25 = sphi 0, %s39
      %s26 = sphi 0, %s35
      %s27 = sphi 0, %s24
      %s28 = sphi 0, %s25
      %s29 = sphi 0, %s26
      %s30 = sphi 0, %s27
      %s31 = sphi 0, %s28
      %s32 = sphi 0, %s29
      %s48 = sphi 0, %s50
      %s51 = sphi 0, %s48
      %s52 = sphi 0, %s51
      %s68 = sphi 0, %s52
      %s74 = sphi 0, %s76
      %s77 = sphi 0, %s74
      %s78 = sphi 0, %s77
      %s94 = sphi 0, %s78
      %s104 = sphi 0, %s106
      %s107 = sphi 0, %s104
      %s108 = sphi 0, %s107
      %s124 = sphi 0, %s108
    $region4: #{tpu_custom_call.1} parent=1 // loop_header_branch
      %20 = sbr.rel (%p18) target = $region8
    $region5: #{tpu_custom_call.1} parent=1 // loop_body
      %s22 = ssub.s32 %s17, 1
      %s23 = ssub.s32 %s17, 2
      %s33 = sadd.s32 1, %s26
      %p34 = scmp.ge.s32.totalorder %s33, 3
      %s35 = scalar_select %p34, 0, %s33
      %s36 = sadd.s32 1, %s25
      %s37 = scalar_select %p34, %s36, %s25
      %p38 = scmp.ge.s32.totalorder %s37, 1
      %s39 = scalar_select %p38, 0, %s37
      %s40 = sadd.s32 1, %s24
      %s41 = scalar_select %p38, %s40, %s24
      %p42 = scmp.ge.s32.totalorder %s41, 2
      %s43 = scalar_select %p42, 0, %s41
      %s44 = ssub.s32 %s24, %s43
      %s45 = ssub.s32 %s25, %s39
      %s46 = sor.u32 %s44, %s45
      %p47 = scmp.eq.s32.totalorder %s46, 0
      %s49 = sadd.s32 %s48, 1
      %s50 = scalar_select %p47, %s48, %s49
      %p53 = pneg %p47
      %p54 = scmp.eq.s32.totalorder %s17, 5
      %p55 = por %p53, %p54
      %p56 = scmp.ne.s32.totalorder %s48, %s51
      %p57 = scmp.eq.s32.totalorder %s17, 0
      %p58 = por %p56, %p57
      %p59 = scmp.ne.s32.totalorder %s48, %s51
      %p60 = scmp.eq.s32.totalorder %s22, 5
      %p61 = por %p59, %p60
      %p62 = scmp.ne.s32.totalorder %s51, %s52
      %p63 = scmp.eq.s32.totalorder %s22, 0
      %p64 = por %p62, %p63
      %p65 = scmp.ne.s32.totalorder %s51, %s52
      %p66 = scmp.eq.s32.totalorder %s23, 5
      %p67 = por %p65, %p66
      %p69 = scmp.ne.s32.totalorder %s52, %s68
      %p70 = scmp.eq.s32.totalorder %s23, 0
      %p71 = por %p69, %p70
      %s72 = ssub.s32 %s26, %s35
      %p73 = scmp.eq.s32.totalorder %s72, 0
      %s75 = sadd.s32 %s74, 1
      %s76 = scalar_select %p73, %s74, %s75
      %p79 = pneg %p73
      %p80 = scmp.eq.s32.totalorder %s17, 5
      %p81 = por %p79, %p80
      %p82 = scmp.ne.s32.totalorder %s74, %s77
      %p83 = scmp.eq.s32.totalorder %s17, 0
      %p84 = por %p82, %p83
      %p85 = scmp.ne.s32.totalorder %s74, %s77
      %p86 = scmp.eq.s32.totalorder %s22, 5
      %p87 = por %p85, %p86
      %p88 = scmp.ne.s32.totalorder %s77, %s78
      %p89 = scmp.eq.s32.totalorder %s22, 0
      %p90 = por %p88, %p89
      %p91 = scmp.ne.s32.totalorder %s77, %s78
      %p92 = scmp.eq.s32.totalorder %s23, 5
      %p93 = por %p91, %p92
      %p95 = scmp.ne.s32.totalorder %s78, %s94
      %p96 = scmp.eq.s32.totalorder %s23, 0
      %p97 = por %p95, %p96
      %s98 = ssub.s32 %s24, %s43
      %s99 = ssub.s32 %s26, %s35
      %s100 = sor.u32 %s98, %s99
      %s101 = ssub.s32 %s25, %s39
      %s102 = sor.u32 %s100, %s101
      %p103 = scmp.eq.s32.totalorder %s102, 0
      %s105 = sadd.s32 %s104, 1
      %s106 = scalar_select %p103, %s104, %s105
      %p109 = pneg %p103
      %p110 = scmp.eq.s32.totalorder %s17, 5
      %p111 = por %p109, %p110
      %p112 = scmp.ne.s32.totalorder %s104, %s107
      %p113 = scmp.eq.s32.totalorder %s17, 0
      %p114 = por %p112, %p113
      %p115 = scmp.ne.s32.totalorder %s104, %s107
      %p116 = scmp.eq.s32.totalorder %s22, 5
      %p117 = por %p115, %p116
      %p118 = scmp.ne.s32.totalorder %s107, %s108
      %p119 = scmp.eq.s32.totalorder %s22, 0
      %p120 = por %p118, %p119
      %p121 = scmp.ne.s32.totalorder %s107, %s108
      %p122 = scmp.eq.s32.totalorder %s23, 5
      %p123 = por %p121, %p122
      %p125 = scmp.ne.s32.totalorder %s108, %s124
      %p126 = scmp.eq.s32.totalorder %s23, 0
      %p127 = por %p125, %p126
      %p128 = scmp.le.s32.totalorder 1, %s17
      %p129 = scmp.lt.s32.totalorder %s17, 7
      %p130 = pnand %p128, %p129
      %p131 = pneg %p130
      // Predicated region
      $region9: #{tpu_custom_call.1} parent=5 // pred_check
        _
      $region10: #{tpu_custom_call.1} parent=5 // pred_check_branch
        %133 = sbr.rel (%p130) target = $region12
      $region11: #{tpu_custom_call.1} parent=5 // pred_region
        %s134 = ssub.s32 %s17, 1
      $region12: #{tpu_custom_call.1} parent=5 // pred_fallthru
        _
      %p135 = scmp.lt.s32.totalorder %s17, 6
      // Predicated region
      $region13: #{tpu_custom_call.1} parent=5 // pred_check
        %p136 = pneg %p135
      $region14: #{tpu_custom_call.1} parent=5 // pred_check_branch
        %138 = sbr.rel (%p136) target = $region16
      $region15: #{tpu_custom_call.1} parent=5 // pred_region
        // Predicated region
        $region17: #{tpu_custom_call.1} parent=15 // pred_check
          %p139 = pneg %p58
        $region18: #{tpu_custom_call.1} parent=15 // pred_check_branch
          %141 = sbr.rel (%p139) target = $region20
        $region19: #{tpu_custom_call.1} parent=15 // pred_region
          %s142 = sand.u32 %s48, 1
          %s143 = scalar_lea.sflag [#allocation3], %s142
          %s144 = sand.u32 %s48, 1
          %s145 = smul.addr %s144, 32
          %s146 = scalar_lea.vmem [#allocation2], %s145
          %s147 = smul.u32 4, %s25
          %s149 = ssub.s32 512, 512
          %150 = vsyncadd %s143, %s149
          %s151 = smul.addr %s24, 4
          %s152 = sadd.s32 %s147, %s151
          %s153 = smul.addr %s152, 128
          %s154 = scalar_lea.hbm %s0, %s153
          %s155 = sshll.u32 %s146, 4
          %s156 = int_to_ptr.vmem [resolvable:$true] %s155
          %161 = dma.hbm_to_vmem [thread:$0]  %s154, 512, %s156, %s143, 128, 128, 8
        $region20: #{tpu_custom_call.1} parent=15 // pred_fallthru
          _
        // Predicated region
        $region21: #{tpu_custom_call.1} parent=15 // pred_check
          %p162 = pneg %p84
        $region22: #{tpu_custom_call.1} parent=15 // pred_check_branch
          %164 = sbr.rel (%p162) target = $region24
        $region23: #{tpu_custom_call.1} parent=15 // pred_region
          %s165 = sand.u32 %s74, 1
          %s166 = scalar_lea.sflag [#allocation6], %s165
          %s167 = sand.u32 %s74, 1
          %s168 = smul.addr %s167, 32
          %s169 = scalar_lea.vmem [#allocation5], %s168
          %s171 = ssub.s32 512, 512
          %172 = vsyncadd %s166, %s171
          %s173 = smul.addr %s26, 4
          %s174 = smul.addr %s173, 128
          %s175 = scalar_lea.hbm %s1, %s174
          %s176 = sshll.u32 %s169, 4
          %s177 = int_to_ptr.vmem [resolvable:$true] %s176
          %182 = dma.hbm_to_vmem [thread:$0]  %s175, 512, %s177, %s166, 128, 128, 8
        $region24: #{tpu_custom_call.1} parent=15 // pred_fallthru
          _
      $region16: #{tpu_custom_call.1} parent=5 // pred_fallthru
        _
      %p183 = scmp.le.s32.totalorder 1, %s17
      %p184 = scmp.lt.s32.totalorder %s17, 7
      %p185 = pnand %p183, %p184
      %p186 = pneg %p185
      // Predicated region
      $region25: #{tpu_custom_call.1} parent=5 // pred_check
        _
      $region26: #{tpu_custom_call.1} parent=5 // pred_check_branch
        %188 = sbr.rel (%p185) target = $region28
      $region27: #{tpu_custom_call.1} parent=5 // pred_region
        %s189 = ssub.s32 %s17, 1
        %s190 = sand.u32 %s51, 1
        %s191 = scalar_lea.sflag [#allocation3], %s190
        %s192 = sand.u32 %s51, 1
        %s193 = smul.addr %s192, 32
        %s194 = scalar_lea.vmem [#allocation2], %s193
        // Predicated region
        $region29: #{tpu_custom_call.1} parent=27 // pred_check
          %p195 = pneg %p64
        $region30: #{tpu_custom_call.1} parent=27 // pred_check_branch
          %197 = sbr.rel (%p195) target = $region32
        $region31: #{tpu_custom_call.1} parent=27 // pred_region
          %198 = dma.done %s191, 512
        $region32: #{tpu_custom_call.1} parent=27 // pred_fallthru
          _
        %s199 = sand.u32 %s77, 1
        %s200 = scalar_lea.sflag [#allocation6], %s199
        %s201 = sand.u32 %s77, 1
        %s202 = smul.addr %s201, 32
        %s203 = scalar_lea.vmem [#allocation5], %s202
        // Predicated region
        $region33: #{tpu_custom_call.1} parent=27 // pred_check
          %p204 = pneg %p90
        $region34: #{tpu_custom_call.1} parent=27 // pred_check_branch
          %206 = sbr.rel (%p204) target = $region36
        $region35: #{tpu_custom_call.1} parent=27 // pred_region
          %207 = dma.done %s200, 512
        $region36: #{tpu_custom_call.1} parent=27 // pred_fallthru
          _
        %s208 = sand.u32 %s51, 1
        %s209 = scalar_lea.sflag [#allocation3], %s208
        %s210 = sand.u32 %s51, 1
        %s211 = smul.addr %s210, 32
        %s212 = scalar_lea.vmem [#allocation2], %s211
        %p213 = pneg %p64
        %p214 = pneg %p61
        %s215 = sand.u32 %s77, 1
        %s216 = scalar_lea.sflag [#allocation6], %s215
        %s217 = sand.u32 %s77, 1
        %s218 = smul.addr %s217, 32
        %s219 = scalar_lea.vmem [#allocation5], %s218
        %p220 = pneg %p90
        %p221 = pneg %p87
        %p222 = pneg %p120
        %p223 = pneg %p117
        %s224 = sand.u32 %s107, 1
        %s225 = scalar_lea.sflag [#allocation4], %s224
        %s226 = sand.u32 %s107, 1
        %s227 = smul.addr %s226, 32
        %s228 = scalar_lea.vmem [#allocation7], %s227
        %s229 = smul.u32 4, %s28
        %s230 = smul.u32 4, %s28
        %v231 = vld [vmem:[%s194] sm:$0xff]
        %v232 = vld [vmem:[%s194 + $0x8] sm:$0xff]
        %v233 = vld [vmem:[%s194 + $0x10] sm:$0xff]
        %v234 = vld [vmem:[%s194 + $0x18] sm:$0xff]
        %v235 = vld [vmem:[%s203] sm:$0xff]
        %v236 = vld [vmem:[%s203 + $0x8] sm:$0xff]
        %v237 = vld [vmem:[%s203 + $0x10] sm:$0xff]
        %v238 = vld [vmem:[%s203 + $0x18] sm:$0xff]
        %vm239 = vcmask 261120
        %v241 = vsel %vm239, %v231, 0
        %v244 = vsel %vm239, %v232, 0
        %v247 = vsel %vm239, %v233, 0
        %v250 = vsel %vm239, %v234, 0
        %252 = vmatprep.subr.mxu0 0.0
        %253 = vmatpush1.msra.mxu0 %v235
        %254 = vmatprep.subr.mxu0 0.0
        %255 = vmatpush1.msra.mxu0 %v236
        %256 = vmatprep.subr.mxu0 0.0
        %257 = vmatpush1.msra.mxu0 %v237
        %258 = vmatprep.subr.mxu0 0.0
        %259 = vmatpush1.msra.mxu0 %v238
        %260 = vmatprep.subr.mxu0 0.0
        %261 = vmatpush1.msra.mxu0 0.0
        %262 = vmatprep.subr.mxu0 0.0
        %263 = vmatpush1.msra.mxu0 0.0
        %264 = vmatprep.subr.mxu0 0.0
        %265 = vmatpush1.msra.mxu0 0.0
        %266 = vmatprep.subr.mxu0 0.0
        %267 = vmatpush1.msra.mxu0 0.0
        %268 = vmatprep.subr.mxu0 0.0
        %269 = vmatpush1.msra.mxu0 0.0
        %270 = vmatprep.subr.mxu0 0.0
        %271 = vmatpush1.msra.mxu0 0.0
        %272 = vmatprep.subr.mxu0 0.0
        %273 = vmatpush1.msra.mxu0 0.0
        %274 = vmatprep.subr.mxu0 0.0
        %275 = vmatpush1.msra.mxu0 0.0
        %276 = vmatprep.subr.mxu0 0.0
        %277 = vmatpush1.msra.mxu0 0.0
        %278 = vmatprep.subr.mxu0 0.0
        %279 = vmatpush1.msra.mxu0 0.0
        %280 = vmatprep.subr.mxu0 0.0
        %281 = vmatpush1.msra.mxu0 0.0
        %282 = vmatprep.subr.mxu0 0.0
        %283 = vmatpush1.msra.mxu0 0.0
        %284 = vmatprep.subr.mxu0 0.0
        %285 = vmatpush1.msra.mxu0 0.0
        %286 = vmatprep.subr.mxu0 0.0
        %287 = vmatpush1.msra.mxu0 0.0
        %288 = vmatprep.subr.mxu0 0.0
        %289 = vmatpush1.msra.mxu0 0.0
        %290 = vmatprep.subr.mxu0 0.0
        %291 = vmatpush1.msra.mxu0 0.0
        %292 = vmatprep.subr.mxu0 0.0
        %293 = vmatpush1.msra.mxu0 0.0
        %294 = vmatprep.subr.mxu0 0.0
        %295 = vmatpush1.msra.mxu0 0.0
        %296 = vmatprep.subr.mxu0 0.0
        %297 = vmatpush1.msra.mxu0 0.0
        %298 = vmatprep.subr.mxu0 0.0
        %299 = vmatpush1.msra.mxu0 0.0
        %300 = vmatprep.subr.mxu0 0.0
        %301 = vmatpush1.msra.mxu0 0.0
        %302 = vmatprep.subr.mxu0 0.0
        %303 = vmatpush1.msra.mxu0 0.0
        %304 = vmatprep.subr.mxu0 0.0
        %305 = vmatpush1.msra.mxu0 0.0
        %306 = vmatprep.subr.mxu0 0.0
        %307 = vmatpush1.msra.mxu0 0.0
        %308 = vmatprep.subr.mxu0 0.0
        %309 = vmatpush1.msra.mxu0 0.0
        %310 = vmatprep.subr.mxu0 0.0
        %311 = vmatpush1.msra.mxu0 0.0
        %312 = vmatprep.subr.mxu0 0.0
        %313 = vmatpush1.msra.mxu0 0.0
        %314 = vmatprep.subr.mxu0 0.0
        %315 = vmatpush1.msra.mxu0 0.0
        %316 = vmatprep.mubr.f32.mxu0 0.0
        %317 = vmatmul.mubr.f32.gmra.mrb[0].mxu0 %v241
        %v318 = vpop.f32.mrb[0].mxu0
        %v319 = vadd.f32 0.0, %v318
        %v320 = vpop.f32.mrb[0].mxu0
        %321 = vmatprep.mubr.f32.mxu0 0.0
        %322 = vmatmul.mubr.f32.gmra.mrb[0].mxu0 %v244
        %v323 = vpop.f32.mrb[0].mxu0
        %v324 = vadd.f32 0.0, %v323
        %v325 = vpop.f32.mrb[0].mxu0
        %326 = vmatprep.mubr.f32.mxu0 0.0
        %327 = vmatmul.mubr.f32.gmra.mrb[0].mxu0 %v247
        %v328 = vpop.f32.mrb[0].mxu0
        %v329 = vadd.f32 0.0, %v328
        %v330 = vpop.f32.mrb[0].mxu0
        %331 = vmatprep.mubr.f32.mxu0 0.0
        %332 = vmatmul.mubr.f32.gmra.mrb[0].mxu0 %v250
        %v333 = vpop.f32.mrb[0].mxu0
        %v334 = vadd.f32 0.0, %v333
        %v335 = vpop.f32.mrb[0].mxu0
        %336 = vdwg.mxu0
        %vm337 = vcmask 523264
        %338 = vst.msk [vmem:[%s228] sm:$0xff] %vm337, %v319
        %339 = vst.msk [vmem:[%s228 + $0x8] sm:$0xff] %vm337, %v324
        %340 = vst.msk [vmem:[%s228 + $0x10] sm:$0xff] %vm337, %v329
        %341 = vst.msk [vmem:[%s228 + $0x18] sm:$0xff] %vm337, %v334
        %s342 = sand.u32 %s107, 1
        %s343 = scalar_lea.sflag [#allocation4], %s342
        %s344 = sand.u32 %s107, 1
        %s345 = smul.addr %s344, 32
        %s346 = scalar_lea.vmem [#allocation7], %s345
        // Predicated region
        $region37: #{tpu_custom_call.1} parent=27 // pred_check
          %p347 = pneg %p117
        $region38: #{tpu_custom_call.1} parent=27 // pred_check_branch
          %349 = sbr.rel (%p347) target = $region40
        $region39: #{tpu_custom_call.1} parent=27 // pred_region
          %s350 = smul.u32 4, %s28
          %s352 = ssub.s32 512, 512
          %353 = vsyncadd %s343, %s352
          %s354 = smul.addr %s29, 4
          %s355 = sadd.s32 %s350, %s354
          %s356 = smul.addr %s27, 12
          %s357 = sadd.s32 %s355, %s356
          %s358 = smul.addr %s357, 128
          %s359 = scalar_lea.hbm %s2, %s358
          %s360 = sshll.u32 %s346, 4
          %s361 = int_to_ptr.vmem [resolvable:$true] %s360
          %366 = dma.vmem_to_hbm [thread:$0]  %s361, 512, %s359, %s343, 128, 128, 8
        $region40: #{tpu_custom_call.1} parent=27 // pred_fallthru
          _
      $region28: #{tpu_custom_call.1} parent=5 // pred_fallthru
        _
      %p367 = scmp.le.s32.totalorder 2, %s17
      // Predicated region
      $region41: #{tpu_custom_call.1} parent=5 // pred_check
        %p368 = pneg %p367
      $region42: #{tpu_custom_call.1} parent=5 // pred_check_branch
        %370 = sbr.rel (%p368) target = $region44
      $region43: #{tpu_custom_call.1} parent=5 // pred_region
        %s371 = ssub.s32 %s17, 2
        // Predicated region
        $region45: #{tpu_custom_call.1} parent=43 // pred_check
          %p372 = pneg %p123
        $region46: #{tpu_custom_call.1} parent=43 // pred_check_branch
          %374 = sbr.rel (%p372) target = $region48
        $region47: #{tpu_custom_call.1} parent=43 // pred_region
          %s375 = sand.u32 %s108, 1
          %s376 = scalar_lea.sflag [#allocation4], %s375
          %s377 = sand.u32 %s108, 1
          %s378 = smul.addr %s377, 32
          %s379 = scalar_lea.vmem [#allocation7], %s378
          %380 = dma.done %s376, 512
        $region48: #{tpu_custom_call.1} parent=43 // pred_fallthru
          _
      $region44: #{tpu_custom_call.1} parent=5 // pred_fallthru
        _
    $region6: #{tpu_custom_call.1} parent=1 // loop_footer
      %s21 = sadd.s32 1, %s17
    $region7: #{tpu_custom_call.1} parent=1 // loop_footer_branch
      %16 = sbr.rel target = $region3
    $region8: #{tpu_custom_call.1} parent=1 // loop_exit
      _
    %381 = vsyncpa [#allocation3], 1
    %s382 = scalar_lea.sflag [#allocation3], 1
    %383 = vsyncpa %s382, 1
    %384 = vsyncpa [#allocation6], 1
    %s385 = scalar_lea.sflag [#allocation6], 1
    %386 = vsyncpa %s385, 1
    %387 = vsyncpa [#allocation4], 1
    %s388 = scalar_lea.sflag [#allocation4], 1
    %389 = vsyncpa %s388, 1

</llo_original>
